<compile_context>
chip_gen: v5e
topology: v5e:2x2
jax: 0.10.0
libtpu: 0.0.40
codegen_flags: <defaults>
</compile_context>

<pallas_src>
import math
import functools

import jax
import jax.numpy as jnp
from jax.experimental import pallas as pl
from jax.experimental.pallas import tpu as pltpu

PAD = 0


def _embed_kernel(ids_ref, sig_ref, table_ref, we_ref, wp_ref, sem, *, tb, vocab):
    # ids_ref:   (n_tok,) int32  SMEM   scalar-prefetched token ids (flat)
    # sig_ref:   (tb, E)  f32    VMEM   pre-scaled timing-signal rows for block
    # table_ref: (V, E)   f32    HBM    full embedding table (memory_space=ANY)
    # we_ref:    (tb, E)  f32    VMEM   output block: word embeddings
    # wp_ref:    (tb, E)  f32    VMEM   output block: word + position embeddings
    # sem:       DMA semaphore
    base = pl.program_id(0) * tb

    # Issue one row-gather DMA per token: HBM table row -> we_ref row.
    @pl.loop(0, tb)
    def _start(t):
        tok = ids_ref[base + t]
        tok = jnp.maximum(jnp.minimum(tok, vocab - 1), 0)  # guard OOB ids
        pltpu.make_async_copy(table_ref.at[tok], we_ref.at[t], sem).start()

    # One matching-size wait per started copy (robust to sem accounting).
    @pl.loop(0, tb)
    def _wait(_):
        pltpu.make_async_copy(table_ref.at[0], we_ref.at[0], sem).wait()

    emb = we_ref[...]
    wp_ref[...] = (emb + sig_ref[...]).astype(wp_ref.dtype)


def _timing_signal(length, channels, min_timescale=1.0, max_timescale=10000.0):
    # Mirrors WordEmbedding.add_timing_signal (without the channels**-0.5 scale).
    position = jnp.arange(length, dtype=jnp.float32)
    num_timescales = channels // 2
    log_timescale_increment = (
        math.log(float(max_timescale) / float(min_timescale))
        / (float(num_timescales) - 1))
    inv_timescales = min_timescale * jnp.exp(
        jnp.arange(num_timescales, dtype=jnp.float32) * -log_timescale_increment)
    scaled_time = position[:, None] * inv_timescales[None, :]
    signal = jnp.concatenate([jnp.sin(scaled_time), jnp.cos(scaled_time)], axis=1)
    pad = channels % 2
    if pad:
        signal = jnp.pad(signal, ((0, 0), (0, pad)))
    return signal  # (L, E)


def _choose_token_block(n_tok, seq_len, token_block):
    """Largest divisor of n_tok that is <= token_block and satisfies the TPU
    block constraints (sublane dim % 8 == 0 or == full dim) for both the
    (n_tok, E) outputs and the timing-signal block carving."""
    divs = set()
    i = 1
    while i * i <= n_tok:
        if n_tok % i == 0:
            divs.add(i)
            divs.add(n_tok // i)
        i += 1

    def ok(tb):
        out_ok = (tb % 8 == 0) or (tb == n_tok)
        sig_ok = (tb % seq_len == 0) or (seq_len % tb == 0)
        return out_ok and sig_ok

    cand = sorted(tb for tb in divs if ok(tb))  # non-empty: tb == n_tok qualifies
    under = [tb for tb in cand if tb <= token_block]
    return under[-1] if under else cand[0]


def word_embedding_forward(x_ids, table, *, position_encoding=True, token_block=256):
    """x_ids: int32 [B, L]; table: f32 [V, E]. Returns (x_w_emb, x_wp_emb)."""
    B, L = x_ids.shape
    V, E = table.shape
    n_tok = B * L

    TB = _choose_token_block(n_tok, L, token_block)
    n_blocks = n_tok // TB

    ids_flat = x_ids.reshape(n_tok).astype(jnp.int32)

    # Pre-scaled timing signal (E**-0.5 folded in once at trace time).
    if position_encoding:
        sig = _timing_signal(L, E) * (float(E) ** -0.5)           # (L, E)
    else:
        sig = jnp.zeros((L, E), jnp.float32)

    if TB % L == 0:
        # A block spans TB // L whole sequences: keep exactly one block worth of
        # signal; it is the same block every step (effectively resident).
        sig_in = jnp.tile(sig, (TB // L, 1))                      # (TB, E)
        sig_map = lambda i, ids: (0, 0)
    else:
        # L % TB == 0: a block is a slice of one sequence; index the small
        # (L, E) signal directly -- no (B*L, E) broadcast ever materialized.
        blocks_per_seq = L // TB
        sig_in = sig                                              # (L, E)
        sig_map = lambda i, ids: (i % blocks_per_seq, 0)

    kernel = functools.partial(_embed_kernel, tb=TB, vocab=V)

    # VMEM budget: 2 outputs double-buffered + signal buffers + headroom,
    # clamped to [32 MiB, 64 MiB] so it is valid on v5e/v6e/v7x alike.
    block_bytes = TB * E * 4
    vmem_est = 2 * 2 * block_bytes + 2 * sig_in.shape[0] * E * 4 + (2 << 20)
    vmem_limit = int(min(max(2 * vmem_est, 32 << 20), 64 << 20))

    we_flat, wp_flat = pl.pallas_call(
        kernel,
        out_shape=(
            jax.ShapeDtypeStruct((n_tok, E), table.dtype),
            jax.ShapeDtypeStruct((n_tok, E), table.dtype),
        ),
        grid_spec=pltpu.PrefetchScalarGridSpec(
            num_scalar_prefetch=1,                    # token ids -> SMEM
            grid=(n_blocks,),
            in_specs=[
                pl.BlockSpec((TB, E), sig_map),       # timing-signal rows
                pl.BlockSpec(memory_space=pl.ANY),    # table stays in HBM
            ],
            out_specs=[
                pl.BlockSpec((TB, E), lambda i, ids: (i, 0)),
                pl.BlockSpec((TB, E), lambda i, ids: (i, 0)),
            ],
            scratch_shapes=[pltpu.SemaphoreType.DMA],
        ),
        compiler_params=pltpu.CompilerParams(
            dimension_semantics=("parallel",),        # v7x: shard over both TCs
            vmem_limit_bytes=vmem_limit,
        ),
    )(ids_flat, sig_in, table)

    x_w_emb = we_flat.reshape(B, L, E)
    x_wp_emb = wp_flat.reshape(B, L, E)
    # emb_dropout = 0.0 (eval / p=0) -> F.dropout is the identity.
    # TODO(synk): training-mode dropout (p > 0) not implemented in-kernel.
    return x_w_emb, x_wp_emb


if __name__ == "__main__":
    # Small shapes: vocab=64, n_embed=128, batch=2, seq=8.
    n_vocab, n_embed = 64, 128
    B, L = 2, 8

    key = jax.random.PRNGKey(0)
    k_w, k_x = jax.random.split(key)

    # nn.init.normal_(we.weight, mean=0, std=n_embed**-0.5); weight[PAD] = 0
    table = (jax.random.normal(k_w, (n_vocab, n_embed), jnp.float32)
             * (n_embed ** -0.5))
    table = table.at[PAD].set(0.0)

    x = jax.random.randint(k_x, (B, L), 0, n_vocab, dtype=jnp.int32)

    x_w_emb, x_wp_emb = word_embedding_forward(x, table, position_encoding=True)
    jax.block_until_ready((x_w_emb, x_wp_emb))

    # Correctness check against plain JAX reference.
    ref_w = table[x]
    ref_wp = ref_w + _timing_signal(L, n_embed)[None] * (float(n_embed) ** -0.5)
    assert jnp.allclose(x_w_emb, ref_w, atol=1e-5), "x_w_emb mismatch"
    assert jnp.allclose(x_wp_emb, ref_wp, atol=1e-5), "x_wp_emb mismatch"

    print("KERNEL_OK")
</pallas_src>

<mosaic_0001>
module attributes {stable_mosaic.version = 11 : i64} {
  func.func @_embed_kernel(%arg0: i32, %arg1: memref<16xi32, #tpu.memory_space<smem>>, %arg2: memref<16x128xf32, #tpu.memory_space<vmem>>, %arg3: memref<64x128xf32, #tpu.memory_space<any>>, %arg4: memref<16x128xf32, #tpu.memory_space<vmem>>, %arg5: memref<16x128xf32, #tpu.memory_space<vmem>>, %arg6: memref<!tpu.dma_semaphore, #tpu.memory_space<semaphore_mem>>) attributes {dimension_semantics = [#tpu.dimension_semantics<parallel>], iteration_bounds = array<i64: 1>, scalar_prefetch = 1 : i64, scratch_operands = 1 : i64, tpu.core_type = #tpu.core_type<tc>, window_params = [{pipeline_mode = #tpu.pipeline_mode<synchronous>, transform_indices = @transform_0, window_bounds = array<i64: 16, 128>}, {}, {transform_indices = @transform_2, window_bounds = array<i64: 16, 128>}, {transform_indices = @transform_3, window_bounds = array<i64: 16, 128>}]} {
    %c16_i32 = arith.constant 16 : i32
    %0 = arith.muli %arg0, %c16_i32 : i32
    %c0_i32 = arith.constant 0 : i32
    %c16_i32_0 = arith.constant 16 : i32
    %1 = arith.addi %c0_i32, %c16_i32_0 : i32
    %c1_i32 = arith.constant 1 : i32
    scf.for %arg7 = %c0_i32 to %1 step %c1_i32  : i32 {
      %c1_i32_10 = arith.constant 1 : i32
      %7 = arith.muli %arg7, %c1_i32_10 : i32
      %c0_i32_11 = arith.constant 0 : i32
      %8 = arith.addi %c0_i32_11, %7 : i32
      %9 = arith.addi %0, %8 : i32
      %10 = arith.index_cast %9 : i32 to index
      %11 = memref.load %arg1[%10] : memref<16xi32, #tpu.memory_space<smem>>
      %c63_i32 = arith.constant 63 : i32
      %12 = arith.minsi %11, %c63_i32 : i32
      %c0_i32_12 = arith.constant 0 : i32
      %13 = arith.maxsi %12, %c0_i32_12 : i32
      %c0_i32_13 = arith.constant 0 : i32
      %14 = tpu.memref_slice %arg3[%13, %c0_i32_13] : memref<64x128xf32, #tpu.memory_space<any>> -> memref<1x128xf32, #tpu.memory_space<any>>
      %15 = tpu.memref_squeeze %14 : memref<1x128xf32, #tpu.memory_space<any>> -> memref<128xf32, #tpu.memory_space<any>>
      %c0_i32_14 = arith.constant 0 : i32
      %16 = tpu.memref_slice %arg4[%8, %c0_i32_14] : memref<16x128xf32, #tpu.memory_space<vmem>> -> memref<1x128xf32, #tpu.memory_space<vmem>>
      %17 = tpu.memref_squeeze %16 : memref<1x128xf32, #tpu.memory_space<vmem>> -> memref<128xf32, #tpu.memory_space<vmem>>
      tpu.enqueue_dma source(%15 : memref<128xf32, #tpu.memory_space<any>>) target(%17 : memref<128xf32, #tpu.memory_space<vmem>>) target_semaphore(%arg6 : memref<!tpu.dma_semaphore, #tpu.memory_space<semaphore_mem>>)
    }
    %c16_i32_1 = arith.constant 16 : i32
    %c0_i32_2 = arith.constant 0 : i32
    %c16_i32_3 = arith.constant 16 : i32
    %2 = arith.addi %c0_i32_2, %c16_i32_3 : i32
    %c1_i32_4 = arith.constant 1 : i32
    scf.for %arg7 = %c0_i32_2 to %2 step %c1_i32_4  : i32 {
      %c0_i32_10 = arith.constant 0 : i32
      %c0_i32_11 = arith.constant 0 : i32
      %c0_i32_12 = arith.constant 0 : i32
      %7 = tpu.memref_slice %arg3[%c0_i32_10, %c0_i32_12] : memref<64x128xf32, #tpu.memory_space<any>> -> memref<1x128xf32, #tpu.memory_space<any>>
      %8 = tpu.memref_squeeze %7 : memref<1x128xf32, #tpu.memory_space<any>> -> memref<128xf32, #tpu.memory_space<any>>
      %c0_i32_13 = arith.constant 0 : i32
      %9 = tpu.memref_slice %arg4[%c0_i32_11, %c0_i32_13] : memref<16x128xf32, #tpu.memory_space<vmem>> -> memref<1x128xf32, #tpu.memory_space<vmem>>
      %10 = tpu.memref_squeeze %9 : memref<1x128xf32, #tpu.memory_space<vmem>> -> memref<128xf32, #tpu.memory_space<vmem>>
      tpu.wait_dma2 semaphore(%arg6 : memref<!tpu.dma_semaphore, #tpu.memory_space<semaphore_mem>>) src(%8 : memref<128xf32, #tpu.memory_space<any>>) dst(%10 : memref<128xf32, #tpu.memory_space<vmem>>)
    }
    %c0 = arith.constant 0 : index
    %c0_5 = arith.constant 0 : index
    %3 = vector.load %arg4[%c0, %c0_5] : memref<16x128xf32, #tpu.memory_space<vmem>>, vector<16x128xf32>
    %c0_6 = arith.constant 0 : index
    %c0_7 = arith.constant 0 : index
    %4 = vector.load %arg2[%c0_6, %c0_7] : memref<16x128xf32, #tpu.memory_space<vmem>>, vector<16x128xf32>
    %5 = arith.addf %3, %4 : vector<16x128xf32>
    %c0_8 = arith.constant 0 : index
    %c0_9 = arith.constant 0 : index
    %6 = vector.load %arg5[%c0_8, %c0_9] : memref<16x128xf32, #tpu.memory_space<vmem>>, vector<16x128xf32>
    tpu.vector_store %arg5[%c0_8, %c0_9], %5 {strides = array<i32>} : memref<16x128xf32, #tpu.memory_space<vmem>>, vector<16x128xf32>,
    return
  }
  func.func @transform_0(%arg0: i32, %arg1: memref<16xi32, #tpu.memory_space<smem>>) -> (i32, i32) {
    %c0_i32 = arith.constant 0 : i32
    %c0_i32_0 = arith.constant 0 : i32
    %c0_i32_1 = arith.constant 0 : i32
    return %c0_i32, %c0_i32_0 : i32, i32
  }
  func.func @transform_2(%arg0: i32, %arg1: memref<16xi32, #tpu.memory_space<smem>>) -> (i32, i32) {
    %c0_i32 = arith.constant 0 : i32
    %c0_i32_0 = arith.constant 0 : i32
    return %arg0, %c0_i32 : i32, i32
  }
  func.func @transform_3(%arg0: i32, %arg1: memref<16xi32, #tpu.memory_space<smem>>) -> (i32, i32) {
    %c0_i32 = arith.constant 0 : i32
    %c0_i32_0 = arith.constant 0 : i32
    return %arg0, %c0_i32 : i32, i32
  }
}

</mosaic_0001>

<llo_original>
// kernel: tpu_custom_call.1
$region0: #{tpu_custom_call.1}
  #allocation0 [shape = 'u32[]', space=smem, size = 0x4, offset = 0x4, fixed_abs, tag = 'smem constant byte address 0x4 - core index']
  #allocation1 [shape = 'u32[72,128]{1,0:T(1,128)}', space=vmem, size = 0x9000, scoped, tag = 'internal scratch']
  #allocation2 [shape = 's32[1]{0}', space=sflag, size = 0x4, scoped, tag = 'scratch operand']
  #allocation3 [shape = 's32[1]{0}', space=sflag, size = 0x4, scoped, tag = 'scoped memory for tpu_custom_call.1']
  #allocation4 [shape = 'u8[512]{0}', space=smem, size = 0x200, scoped, tag = 'prefetched SMEM operand 0']
  #allocation11 [shape = 's32[]', space=sflag, size = 0x4, offset = 0, fixed_abs, tag = 'sflag constant byte address 0x0 - dummy sync flag']
  #allocation12 [shape = 's32[]', space=sflag, size = 0x4, offset = 0, fixed_abs, tag = 'sflag constant byte address 0x0 - dummy sync flag']
  #allocation13 [shape = 'u32[]', space=smem, size = 0x4, offset = 0x44, fixed_abs, tag = 'smem constant byte address 0x44 - assertion arg 0']
  #allocation14 [shape = 'u32[]', space=smem, size = 0x4, offset = 0x48, fixed_abs, tag = 'smem constant byte address 0x48 - assertion arg 1']
  %s0 = inlined_call_operand.hbm [shape: s32[16], index: 0, kind: input, shape index: {}]
  %s1 = inlined_call_operand.hbm [shape: f32[16,128], index: 1, kind: input, shape index: {}]
  %s2 = inlined_call_operand.hbm [shape: f32[64,128], index: 2, kind: input, shape index: {}]
  %s3 = inlined_call_operand.hbm [shape: f32[16,128], index: 3, kind: output, shape index: {0}]
  %s4 = inlined_call_operand.hbm [shape: f32[16,128], index: 4, kind: output, shape index: {1}]
  %5 = xla_tuple %s3, %s4
  %s6 = sld [smem:[#allocation0]]
  $region44: #{tpu_custom_call.1} parent=0
    _
  %s8 = ssub.s32 1, %s6
  %s9 = scalar_select 0, %s8, %s6
  %s11 = sshll.u32 %s0, 4
  %s12 = int_to_ptr.hbm [resolvable:$true] %s11
  %14 = dma.hbm_to_smem %s12, 16, [#allocation4], [#allocation3]
  %16 = dma.done [#allocation3], 16
  %17 = sfence
  $region1: #{tpu_custom_call.1} parent=0
    #allocation5 [shape = 'u8[8192]{0}', space=vmem, size = 0x2000, scoped, tag = 'input window, operand 1, single buffered']
    #allocation6 [shape = 's32[1]{0}', space=sflag, size = 0x4, scoped, tag = 'scoped memory for tpu_custom_call.1']
    #allocation7 [shape = 's32[1]{0}', space=sflag, size = 0x4, scoped, tag = 'scoped memory for tpu_custom_call.1']
    #allocation8 [shape = 'u8[8192]{0}', space=vmem, size = 0x2000, scoped, tag = 'output window, operand 0, single buffered']
    #allocation9 [shape = 'u8[8192]{0}', space=vmem, size = 0x2000, scoped, tag = 'output window, operand 1, single buffered']
    #allocation10 [shape = 's32[1]{0}', space=sflag, size = 0x4, scoped, tag = 'scoped memory for tpu_custom_call.1']
    %18 = vsyncpa [#allocation6], 0
    %19 = vsyncpa [#allocation7], 0
    %20 = vsyncpa [#allocation10], 0
    // Predicated region
    $region2: #{tpu_custom_call.1} parent=1 // pred_check
      _
    $region3: #{tpu_custom_call.1} parent=1 // pred_check_branch
      %22 = sbr.rel (0) target = $region5
    $region4: #{tpu_custom_call.1} parent=1 // pred_region
      %24 = vsyncadd [#allocation6], 0
      %s25 = sshll.u32 %s1, 4
      %s26 = int_to_ptr.hbm [resolvable:$true] %s25
      %s27 = sshll.u32 [#allocation5], 4
      %s28 = int_to_ptr.vmem [resolvable:$true] %s27
      %33 = dma.hbm_to_vmem [thread:$0]  %s26, 256, %s28, [#allocation6], 128, 128, 8
    $region5: #{tpu_custom_call.1} parent=1 // pred_fallthru
      _
    // Predicated region
    $region6: #{tpu_custom_call.1} parent=1 // pred_check
      _
    $region7: #{tpu_custom_call.1} parent=1 // pred_check_branch
      %35 = sbr.rel (0) target = $region9
    $region8: #{tpu_custom_call.1} parent=1 // pred_region
      %37 = dma.done [#allocation6], 256
    $region9: #{tpu_custom_call.1} parent=1 // pred_fallthru
      _
    %s38 = smul.u32 0, 16
    loop: start=0, step=1, limit=16
    $region10: #{tpu_custom_call.1} parent=1 // loop_pre_header
      _
    $region11: #{tpu_custom_call.1} parent=1 // loop_header
      %s40 = sphi 0, %s44
      %p41 = scmp.ge.s32.totalorder %s40, 16
    $region12: #{tpu_custom_call.1} parent=1 // loop_header_branch
      %43 = sbr.rel (%p41) target = $region16
    $region13: #{tpu_custom_call.1} parent=1 // loop_body
      %s45 = sadd.s32 %s38, %s40
      %s46 = sld [smem:[#allocation4 + %s45]]
      %p47 = scmp.lt.s32.totalorder %s46, 63
      %s48 = scalar_select %p47, %s46, 63
      %p49 = scmp.gt.s32.totalorder %s48, 0
      %s50 = scalar_select %p49, %s48, 0
      %s51 = scalar_lea.hbm %s2, %s50
      %s52 = scalar_lea.vmem [#allocation8], %s40
      // Predicated region
      $region17: #{tpu_custom_call.1} parent=13 // pred_check
        _
      $region18: #{tpu_custom_call.1} parent=13 // pred_check_branch
        %54 = sbr.rel target = $region20
      $region19: #{tpu_custom_call.1} parent=13 // pred_region
        %55 = sst [smem:[#allocation13]] [#allocation12]
        %56 = sst [smem:[#allocation14]] [#allocation11]
      $region20: #{tpu_custom_call.1} parent=13 // pred_fallthru
        _
      %58 = shalt.err (0)
      %s60 = sshll.u32 %s51, 4
      %s61 = int_to_ptr.hbm [resolvable:$true] %s60
      %s62 = sshll.u32 %s52, 4
      %s63 = int_to_ptr.vmem [resolvable:$true] %s62
      %65 = dma.hbm_to_vmem [thread:$0]  %s61, 16, %s63, [#allocation2]
    $region14: #{tpu_custom_call.1} parent=1 // loop_footer
      %s44 = sadd.s32 1, %s40
    $region15: #{tpu_custom_call.1} parent=1 // loop_footer_branch
      %39 = sbr.rel target = $region11
    $region16: #{tpu_custom_call.1} parent=1 // loop_exit
      _
    loop: start=0, step=1, limit=16
    $region21: #{tpu_custom_call.1} parent=1 // loop_pre_header
      _
    $region22: #{tpu_custom_call.1} parent=1 // loop_header
      %s67 = sphi 0, %s71
      %p68 = scmp.ge.s32.totalorder %s67, 16
    $region23: #{tpu_custom_call.1} parent=1 // loop_header_branch
      %70 = sbr.rel (%p68) target = $region27
    $region24: #{tpu_custom_call.1} parent=1 // loop_body
      %73 = dma.done [#allocation2], 16
    $region25: #{tpu_custom_call.1} parent=1 // loop_footer
      %s71 = sadd.s32 1, %s67
    $region26: #{tpu_custom_call.1} parent=1 // loop_footer_branch
      %66 = sbr.rel target = $region22
    $region27: #{tpu_custom_call.1} parent=1 // loop_exit
      _
    %v74 = vld [vmem:[#allocation8] sm:$0xff]
    %v75 = vld [vmem:[#allocation8 + $0x8] sm:$0xff]
    %v76 = vld [vmem:[#allocation5] sm:$0xff]
    %v77 = vld [vmem:[#allocation5 + $0x8] sm:$0xff]
    %v78 = vadd.f32 %v74, %v76
    %v79 = vadd.f32 %v75, %v77
    %80 = vst [vmem:[#allocation9] sm:$0xff] %v78
    %81 = vst [vmem:[#allocation9 + $0x8] sm:$0xff] %v79
    // Predicated region
    $region28: #{tpu_custom_call.1} parent=1 // pred_check
      _
    $region29: #{tpu_custom_call.1} parent=1 // pred_check_branch
      %83 = sbr.rel (0) target = $region31
    $region30: #{tpu_custom_call.1} parent=1 // pred_region
      %85 = vsyncadd [#allocation7], 0
      %s86 = sshll.u32 [#allocation8], 4
      %s87 = int_to_ptr.vmem [resolvable:$true] %s86
      %s88 = sshll.u32 %s3, 4
      %s89 = int_to_ptr.hbm [resolvable:$true] %s88
      %94 = dma.vmem_to_hbm [thread:$0]  %s87, 256, %s89, [#allocation7], 128, 128, 8
    $region31: #{tpu_custom_call.1} parent=1 // pred_fallthru
      _
    // Predicated region
    $region32: #{tpu_custom_call.1} parent=1 // pred_check
      _
    $region33: #{tpu_custom_call.1} parent=1 // pred_check_branch
      %96 = sbr.rel (0) target = $region35
    $region34: #{tpu_custom_call.1} parent=1 // pred_region
      %98 = vsyncadd [#allocation10], 0
      %s99 = sshll.u32 [#allocation9], 4
      %s100 = int_to_ptr.vmem [resolvable:$true] %s99
      %s101 = sshll.u32 %s4, 4
      %s102 = int_to_ptr.hbm [resolvable:$true] %s101
      %107 = dma.vmem_to_hbm [thread:$0]  %s100, 256, %s102, [#allocation10], 128, 128, 8
    $region35: #{tpu_custom_call.1} parent=1 // pred_fallthru
      _
    // Predicated region
    $region36: #{tpu_custom_call.1} parent=1 // pred_check
      _
    $region37: #{tpu_custom_call.1} parent=1 // pred_check_branch
      %109 = sbr.rel (0) target = $region39
    $region38: #{tpu_custom_call.1} parent=1 // pred_region
      %111 = dma.done [#allocation7], 256
    $region39: #{tpu_custom_call.1} parent=1 // pred_fallthru
      _
    // Predicated region
    $region40: #{tpu_custom_call.1} parent=1 // pred_check
      _
    $region41: #{tpu_custom_call.1} parent=1 // pred_check_branch
      %113 = sbr.rel (0) target = $region43
    $region42: #{tpu_custom_call.1} parent=1 // pred_region
      %115 = dma.done [#allocation10], 256
    $region43: #{tpu_custom_call.1} parent=1 // pred_fallthru
      _
    %116 = vsyncpa [#allocation6], 1
    %117 = vsyncpa [#allocation7], 1
    %118 = vsyncpa [#allocation10], 1
  %119 = vsyncmov [#allocation2]
  %s120 = vpop.sfrf %119
  %p121 = scmp.eq.s32.totalorder %s120, 0
  %p122 = pneg %p121
  %124 = shalt.err (%p122)

</llo_original>
